<compile_context>
chip_gen: v7x
topology: tpu7x:2x2x1
jax: 0.10.0
libtpu: 0.0.40
codegen_flags: <defaults>
</compile_context>

<pallas_src>
import math
import functools

import jax
import jax.numpy as jnp
from jax.experimental import pallas as pl
from jax.experimental.pallas import tpu as pltpu

_HASH_MULT = 0x9E3779B1                      # odd golden-ratio constant
_HASH_MULT_I32 = _HASH_MULT - (1 << 32)      # same bits as a wrapped int32


def _pe_dropout_kernel(seed_ref, x_ref, pe_ref, o_ref, *, p, training, n_cols):
    x = x_ref[...]                           # (BR, TL), input dtype
    y = x + pe_ref[...]                      # PE already x.dtype; (1, TL) broadcasts over rows

    if training and p > 0.0:
        br, tl = x_ref.shape
        # ---- dropout mask: hash of the global element index (tile-invariant) ----
        # (global_idx + seed) * M  (mod 2^32)  is split into:
        #   * a loop-invariant constant  off_m = (iota0*n_cols + iota1) * M
        #   * a scalar-unit term         base_m = (row0*n_cols + col0 + seed) * M
        # so the per-step vector work is: add, shift, xor, shift, cmp, mul, select.
        # TODO(synk): for bf16 activations on v7x, pltpu.prng_random_bits (hardware
        # PRNG) would drop this to ~1 op/vreg, at the cost of a tiling-dependent
        # RNG stream; the portable, tile-invariant hash is kept here.
        base = (pl.program_id(1) * (br * n_cols)
                + pl.program_id(0) * tl
                + seed_ref[0])                               # scalar int32
        base_m = (base * _HASH_MULT_I32).astype(jnp.uint32)  # scalar wrap-mul, bitcast
        off = (jax.lax.broadcasted_iota(jnp.int32, (br, tl), 0) * n_cols
               + jax.lax.broadcasted_iota(jnp.int32, (br, tl), 1))
        off_m = (off * _HASH_MULT_I32).astype(jnp.uint32)    # loop-invariant constant
        h = off_m + base_m                                    # == (idx + seed) * M  mod 2^32
        h = h ^ (h >> 16)                                     # single xorshift finalizer
        # Integer-threshold compare on the top 24 bits: keep w.p. (1 - p).
        # (thr == 2^24 when p == 1.0 -> everything dropped, no inf/nan.)
        thr = jnp.int32(min(1 << 24, int(round(p * float(1 << 24)))))
        keep = (h >> 8).astype(jnp.int32) >= thr
        scale = jnp.asarray(1.0 / (1.0 - p) if p < 1.0 else 0.0, dtype=y.dtype)
        y = jnp.where(keep, y * scale, jnp.zeros_like(y))

    o_ref[...] = y.astype(o_ref.dtype)


def _choose_tiles(b, n, itemsize):
    """Pick (row_tile, lane_tile) for the folded (B, S*D) layout.

    Row tile: full sublane-packing depth for the dtype (8 rows for 4-byte,
    16 for 2-byte, 32 for 1-byte) so packed vregs are full and stores are
    unmasked; falls back to the whole batch if B is small / misaligned.

    Lane tile: largest power-of-two multiple of 128 dividing S*D such that the
    double-buffered working set 2*(2*br + 1)*tl*itemsize stays under ~12 MiB,
    i.e. inside the scoped-VMEM defaults of v5e (16 MiB) and v6e/v7x (32 MiB;
    v7x is 64 MiB physical).  Targets ~1-4 MiB blocks so the ~0.35 us per-step
    pipeline overhead is negligible vs HBM transfer time.
    """
    sub = max(8, 32 // max(int(itemsize), 1))
    br = sub if (b >= sub and b % sub == 0) else b
    budget = 12 * 1024 * 1024
    tl = n
    for cand in (65536, 32768, 16384, 8192, 4096, 2048, 1024, 512, 256, 128):
        if n % cand == 0 and 2 * (2 * br + 1) * cand * itemsize <= budget:
            tl = cand
            break
    return br, tl


def make_positional_encoding(d_model, max_seq_len, dtype=jnp.float32):
    """Deterministic sinusoidal PE buffer, shape (1, max_seq_len, d_model)."""
    position = jnp.arange(max_seq_len, dtype=jnp.float32)[:, None]              # (L, 1)
    div_term = jnp.exp(jnp.arange(0, d_model, 2, dtype=jnp.float32)
                       * (-math.log(10000.0) / d_model))                        # (D/2,)
    pe = jnp.zeros((max_seq_len, d_model), dtype=jnp.float32)
    pe = pe.at[:, 0::2].set(jnp.sin(position * div_term))
    pe = pe.at[:, 1::2].set(jnp.cos(position * div_term))
    return pe[None].astype(dtype)                                               # (1, L, D)


def positional_encoder(x, pe, *, p=0.1, training=True, seed=0):
    """x: (B, S, D); pe: (1, max_seq_len, D).  Returns dropout(x + pe[:, :S, :])."""
    B, S, D = x.shape
    n = S * D
    # Fold (S, D) into one lane-dense trailing axis -> wide unmasked stores.
    # Exact for PE too since PE only depends on (position, dim).
    x2 = x.reshape(B, n)
    pe2 = pe[:, :S, :].reshape(1, n).astype(x.dtype)   # cast once in the wrapper
    seed_arr = jnp.asarray([seed], dtype=jnp.int32)

    br, tl = _choose_tiles(B, n, jnp.dtype(x.dtype).itemsize)
    # Batch-rows innermost: the PE index_map ignores that axis, so the PE tile
    # stays resident in VMEM across batch steps (no re-DMA of PE).
    grid = (n // tl, B // br)

    kernel = functools.partial(
        _pe_dropout_kernel, p=float(p), training=bool(training), n_cols=n)

    out2 = pl.pallas_call(
        kernel,
        out_shape=jax.ShapeDtypeStruct((B, n), x.dtype),
        grid=grid,
        in_specs=[
            pl.BlockSpec(memory_space=pltpu.SMEM),             # seed scalar
            pl.BlockSpec((br, tl), lambda l, r: (r, l)),       # x tile
            pl.BlockSpec((1, tl), lambda l, r: (0, l)),        # pe tile (batch-invariant)
        ],
        out_specs=pl.BlockSpec((br, tl), lambda l, r: (r, l)),
        # Output reuses x2's HBM buffer: free footprint win, no semantic change.
        input_output_aliases={1: 0},
        compiler_params=pltpu.CompilerParams(
            dimension_semantics=("parallel", "parallel")),
    )(seed_arr, x2, pe2)
    return out2.reshape(B, S, D)


if __name__ == "__main__":
    d_model = 32
    max_seq_len = 16
    B, S = 2, 8
    p = 0.1

    key = jax.random.PRNGKey(0)
    x = jax.random.normal(key, (B, S, d_model), dtype=jnp.float32)
    pe = make_positional_encoding(d_model, max_seq_len)
    ref = x + pe[:, :S, :]

    # Training-mode forward: mask * (x + pe) / (1 - p).  Keep-probability
    # semantics match PyTorch train mode; the RNG stream intentionally differs.
    out_train = positional_encoder(x, pe, p=p, training=True, seed=1234)
    jax.block_until_ready(out_train)
    # Every surviving element must equal (x + pe) / (1 - p).
    diff = jnp.where(out_train != 0.0, out_train - ref / (1.0 - p), 0.0)
    assert float(jnp.max(jnp.abs(diff))) < 1e-4, "train-mode kept values mismatch"

    # Eval-mode forward (dropout = identity) checked against a pure-JAX reference.
    out_eval = positional_encoder(x, pe, p=p, training=False)
    jax.block_until_ready(out_eval)
    assert jnp.allclose(out_eval, ref, atol=1e-6), "eval-mode mismatch vs reference"

    print("KERNEL_OK")
</pallas_src>

<mosaic_0001>
module attributes {stable_mosaic.version = 11 : i64} {
  func.func @_pe_dropout_kernel(%arg0: i32, %arg1: i32, %arg2: memref<1xi32, #tpu.memory_space<smem>>, %arg3: memref<2x256xf32, #tpu.memory_space<vmem>>, %arg4: memref<1x256xf32, #tpu.memory_space<vmem>>, %arg5: memref<2x256xf32, #tpu.memory_space<vmem>>) attributes {dimension_semantics = [#tpu.dimension_semantics<parallel>, #tpu.dimension_semantics<parallel>], iteration_bounds = array<i64: 1, 1>, scalar_prefetch = 0 : i64, scratch_operands = 0 : i64, tpu.core_type = #tpu.core_type<tc>, window_params = [{transform_indices = @transform_0, window_bounds = array<i64: 1>}, {transform_indices = @transform_1, window_bounds = array<i64: 2, 256>}, {transform_indices = @transform_2, window_bounds = array<i64: 1, 256>}, {transform_indices = @transform_3, window_bounds = array<i64: 2, 256>}]} {
    %c0 = arith.constant 0 : index
    %c0_0 = arith.constant 0 : index
    %0 = vector.load %arg3[%c0, %c0_0] : memref<2x256xf32, #tpu.memory_space<vmem>>, vector<2x256xf32>
    %c0_1 = arith.constant 0 : index
    %c0_2 = arith.constant 0 : index
    %1 = vector.load %arg4[%c0_1, %c0_2] : memref<1x256xf32, #tpu.memory_space<vmem>>, vector<1x256xf32>
    %2 = vector.broadcast %1 : vector<1x256xf32> to vector<2x256xf32>
    %3 = arith.addf %0, %2 : vector<2x256xf32>
    %c512_i32 = arith.constant 512 : i32
    %4 = arith.muli %arg1, %c512_i32 : i32
    %c256_i32 = arith.constant 256 : i32
    %5 = arith.muli %arg0, %c256_i32 : i32
    %6 = arith.addi %4, %5 : i32
    %c0_3 = arith.constant 0 : index
    %7 = memref.load %arg2[%c0_3] : memref<1xi32, #tpu.memory_space<smem>>
    %8 = arith.addi %6, %7 : i32
    %c-1640531535_i32 = arith.constant -1640531535 : i32
    %9 = arith.muli %8, %c-1640531535_i32 : i32
    %10 = tpu.iota {dimensions = array<i32: 0>} : vector<2x256xi32>
    %c256_i32_4 = arith.constant 256 : i32
    %11 = vector.broadcast %c256_i32_4 : i32 to vector<2x256xi32>
    %12 = arith.muli %10, %11 : vector<2x256xi32>
    %13 = tpu.iota {dimensions = array<i32: 1>} : vector<2x256xi32>
    %14 = arith.addi %12, %13 : vector<2x256xi32>
    %c-1640531535_i32_5 = arith.constant -1640531535 : i32
    %15 = vector.broadcast %c-1640531535_i32_5 : i32 to vector<2x256xi32>
    %16 = arith.muli %14, %15 : vector<2x256xi32>
    %17 = vector.broadcast %9 : i32 to vector<2x256xi32>
    %18 = arith.addi %16, %17 : vector<2x256xi32>
    %c16_i32 = arith.constant 16 : i32
    %19 = vector.broadcast %c16_i32 : i32 to vector<2x256xi32>
    %20 = arith.shrui %18, %19 : vector<2x256xi32>
    %21 = arith.xori %18, %20 : vector<2x256xi32>
    %c8_i32 = arith.constant 8 : i32
    %22 = vector.broadcast %c8_i32 : i32 to vector<2x256xi32>
    %23 = arith.shrui %21, %22 : vector<2x256xi32>
    %c1677722_i32 = arith.constant 1677722 : i32
    %24 = vector.broadcast %c1677722_i32 : i32 to vector<2x256xi32>
    %25 = arith.cmpi sge, %23, %24 : vector<2x256xi32>
    %cst = arith.constant 1.11111116 : f32
    %26 = vector.broadcast %cst : f32 to vector<2x256xf32>
    %27 = arith.mulf %3, %26 : vector<2x256xf32>
    %cst_6 = arith.constant 0.000000e+00 : f32
    %28 = vector.broadcast %cst_6 : f32 to vector<2x256xf32>
    %29 = arith.select %25, %27, %28 : vector<2x256xi1>, vector<2x256xf32>
    %c0_7 = arith.constant 0 : index
    %c0_8 = arith.constant 0 : index
    %30 = vector.load %arg5[%c0_7, %c0_8] : memref<2x256xf32, #tpu.memory_space<vmem>>, vector<2x256xf32>
    tpu.vector_store %arg5[%c0_7, %c0_8], %29 {strides = array<i32>} : memref<2x256xf32, #tpu.memory_space<vmem>>, vector<2x256xf32>,
    return
  }
  func.func @transform_0(%arg0: i32, %arg1: i32) -> i32 {
    %c0_i32 = arith.constant 0 : i32
    %c0_i32_0 = arith.constant 0 : i32
    return %c0_i32 : i32
  }
  func.func @transform_1(%arg0: i32, %arg1: i32) -> (i32, i32) {
    %c0_i32 = arith.constant 0 : i32
    return %arg1, %arg0 : i32, i32
  }
  func.func @transform_2(%arg0: i32, %arg1: i32) -> (i32, i32) {
    %c0_i32 = arith.constant 0 : i32
    %c0_i32_0 = arith.constant 0 : i32
    return %c0_i32, %arg0 : i32, i32
  }
  func.func @transform_3(%arg0: i32, %arg1: i32) -> (i32, i32) {
    %c0_i32 = arith.constant 0 : i32
    return %arg1, %arg0 : i32, i32
  }
}

</mosaic_0001>

<llo_original>
// kernel: tpu_custom_call.1
$region0: #{tpu_custom_call.1}
  #allocation0 [shape = 'u32[]', space=smem, size = 0x4, offset = 0x4, fixed_abs, tag = 'smem constant byte address 0x4 - core index']
  #allocation1 [shape = 'u32[144,128]{1,0:T(1,128)}', space=vmem, size = 0x12000, scoped, tag = 'internal scratch']
  #allocation2 [shape = 's32[1]{0:T(128)S(6)}', space=smem, size = 0x200, scoped, tag = 'scoped memory for tpu_custom_call.1']
  %s0 = inlined_call_operand.<no memory space> [shape: s32[1], index: 0, kind: input, shape index: {}]
  %s1 = inlined_call_operand.hbm [shape: f32[2,256], index: 1, kind: input, shape index: {}, may-alias: {1,3}]
  %s2 = inlined_call_operand.vmem [shape: f32[1,256], index: 2, kind: input, shape index: {}]
  %s3 = inlined_call_operand.hbm [shape: f32[2,256], index: 3, kind: output, shape index: {}, may-alias: {1,3}]
  %s4 = sld [smem:[#allocation0]]
  $region26: #{tpu_custom_call.1} parent=0
    _
  %s6 = ssub.s32 1, %s4
  %s7 = scalar_select 0, %s6, %s4
  %8 = sst [smem:[#allocation2]] %s0
  $region1: #{tpu_custom_call.1} parent=0
    #allocation3 [shape = 'u8[2048]{0}', space=vmem, size = 0x800, scoped, tag = 'input window, operand 1, single buffered']
    #allocation4 [shape = 's32[1]{0}', space=sflag, size = 0x4, scoped, tag = 'scoped memory for tpu_custom_call.1']
    #allocation5 [shape = 's32[1]{0}', space=sflag, size = 0x4, scoped, tag = 'scoped memory for tpu_custom_call.1']
    #allocation6 [shape = 'u8[2048]{0}', space=vmem, size = 0x800, scoped, tag = 'output window, operand 0, single buffered']
    %9 = vsyncpa [#allocation4], 0
    %10 = vsyncpa [#allocation5], 0
    // Predicated region
    $region2: #{tpu_custom_call.1} parent=1 // pred_check
      _
    $region3: #{tpu_custom_call.1} parent=1 // pred_check_branch
      %12 = sbr.rel (0) target = $region5
    $region4: #{tpu_custom_call.1} parent=1 // pred_region
      _
    $region5: #{tpu_custom_call.1} parent=1 // pred_fallthru
      _
    // Predicated region
    $region6: #{tpu_custom_call.1} parent=1 // pred_check
      _
    $region7: #{tpu_custom_call.1} parent=1 // pred_check_branch
      %14 = sbr.rel (0) target = $region9
    $region8: #{tpu_custom_call.1} parent=1 // pred_region
      %s16 = ssub.s32 64, 64
      %17 = vsyncadd [#allocation4], %s16
      %s19 = sshll.u32 [#allocation3], 4
      %s20 = int_to_ptr.vmem [resolvable:$true] %s19
      %22 = dma.hbm_to_vmem [thread:$0]  %s1, 64, %s20, [#allocation4]
    $region9: #{tpu_custom_call.1} parent=1 // pred_fallthru
      _
    // Predicated region
    $region10: #{tpu_custom_call.1} parent=1 // pred_check
      _
    $region11: #{tpu_custom_call.1} parent=1 // pred_check_branch
      %24 = sbr.rel (0) target = $region13
    $region12: #{tpu_custom_call.1} parent=1 // pred_region
      _
    $region13: #{tpu_custom_call.1} parent=1 // pred_fallthru
      _
    // Predicated region
    $region14: #{tpu_custom_call.1} parent=1 // pred_check
      _
    $region15: #{tpu_custom_call.1} parent=1 // pred_check_branch
      %26 = sbr.rel (0) target = $region17
    $region16: #{tpu_custom_call.1} parent=1 // pred_region
      %27 = dma.done [#allocation4], 64
    $region17: #{tpu_custom_call.1} parent=1 // pred_fallthru
      _
    %v28 = vld [vmem:[#allocation3] sm:$0xf]
    %v29 = vld [vmem:[%s2] sm:$0x3]
    %v31 = vlaneseq
    %v32 = vshrl.u32 %v31, 7
    %v33 = vsub.s32 0, %v32
    %v34 = vrot.slane %v29, %v33
    %v35 = vlaneseq
    %v36 = vshrl.u32 %v35, 7
    %v37 = vsub.s32 1, %v36
    %v38 = vrot.slane %v29, %v37
    %v39 = vcombine.low %v34, %v38
    %v41 = vunpack.c.l.s4 1983009808
    %v42 = vunpack.c.0.s8 %v41
    %v43 = vlaneseq
    %v44 = vshrl.u32 %v43, 7
    %v45 = vsub.s32 %v42, %v44
    %v46 = vrot.slane %v39, %v45
    %v48 = vadd.f32 %v28, %v46
    %s49 = smul.u32 0, 512
    %s50 = smul.u32 0, 256
    %s51 = sadd.s32 %s49, %s50
    %s52 = sld [smem:[#allocation2]]
    %s53 = sadd.s32 %s51, %s52
    %s54 = smul.u32 %s53, 2654435761
    %v55 = vlaneseq
    %v56 = vshrl.u32 %v55, 7
    %v57 = vmul.u32 %v56, 256
    %v58 = vlaneseq
    %v59 = vand.u32 %v58, 127
    %v60 = vadd.s32 %v59, 128
    %v61 = vadd.s32 %v57, %v59
    %v62 = vadd.s32 %v57, %v60
    %v63 = vmul.u32 %v61, 2654435761
    %v64 = vmul.u32 %v62, 2654435761
    %v65 = vstv %s54
    %v66 = vadd.s32 %v63, %v65
    %v67 = vadd.s32 %v64, %v65
    %v68 = vshrl.u32 %v66, 16
    %v69 = vshrl.u32 %v67, 16
    %v70 = vxor.u32 %v66, %v68
    %v71 = vxor.u32 %v67, %v69
    %v72 = vshrl.u32 %v70, 8
    %v73 = vshrl.u32 %v71, 8
    %vm74 = vcmp.ge.s32.totalorder %v72, 1677722
    %vm75 = vcmp.ge.s32.totalorder %v73, 1677722
    %v76 = vmul.f32 %v48, 1.1111112
    %v79 = vunpack.c.l.s4 1983009808
    %v80 = vunpack.c.0.s8 %v79
    %v81 = vlaneseq
    %v82 = vshrl.u32 %v81, 7
    %v83 = vsub.s32 %v80, %v82
    %v84 = vrot.slane %v76, %v83
    %v85 = vcombine.high %v84, %v84
    %v88 = vsel %vm74, %v84, 0.0
    %v89 = vsel %vm75, %v85, 0.0
    %v92 = vcombine.low %v88, %v89
    %v94 = vunpack.c.l.s4 1983009808
    %v95 = vunpack.c.0.s8 %v94
    %v96 = vlaneseq
    %v97 = vshrl.u32 %v96, 7
    %v98 = vsub.s32 %v95, %v97
    %v99 = vrot.slane %v92, %v98
    %101 = vst [vmem:[#allocation6] sm:$0xf] %v99
    // Predicated region
    $region18: #{tpu_custom_call.1} parent=1 // pred_check
      _
    $region19: #{tpu_custom_call.1} parent=1 // pred_check_branch
      %103 = sbr.rel (0) target = $region21
    $region20: #{tpu_custom_call.1} parent=1 // pred_region
      %s105 = ssub.s32 64, 64
      %106 = vsyncadd [#allocation5], %s105
      %s108 = sshll.u32 [#allocation6], 4
      %s109 = int_to_ptr.vmem [resolvable:$true] %s108
      %111 = dma.vmem_to_hbm [thread:$0]  %s109, 64, %s3, [#allocation5]
    $region21: #{tpu_custom_call.1} parent=1 // pred_fallthru
      _
    // Predicated region
    $region22: #{tpu_custom_call.1} parent=1 // pred_check
      _
    $region23: #{tpu_custom_call.1} parent=1 // pred_check_branch
      %113 = sbr.rel (0) target = $region25
    $region24: #{tpu_custom_call.1} parent=1 // pred_region
      %114 = dma.done [#allocation5], 64
    $region25: #{tpu_custom_call.1} parent=1 // pred_fallthru
      _
    %115 = vsyncpa [#allocation4], 1
    %116 = vsyncpa [#allocation5], 1

</llo_original>
